<compile_context>
chip_gen: v7x
topology: tpu7x:2x2x1
jax: 0.10.0
libtpu: 0.0.40
codegen_flags: <defaults>
</compile_context>

<pallas_src>
import numpy as np
import jax
import jax.numpy as jnp
from jax import lax
from jax.experimental import pallas as pl
from jax.experimental.pallas import tpu as pltpu

# ---- module configuration (matches the PyTorch VisionAttentionNeuronLayer) ----
ACT_DIM = 3
HIDDEN_DIM = 16          # pos-embedding query rows == output rows
MSG_DIM = 32
POS_EM_DIM = 8
PATCH_SIZE = 4
STACK_K = 4
LN_EPS = 1e-5            # torch.nn.LayerNorm default eps

PP = PATCH_SIZE * PATCH_SIZE                  # 16 pixels per (patch, frame)
DIM_K = (STACK_K - 1) * PP + ACT_DIM          # 51 key features (diff pixels + action)
DIM_V = STACK_K * PP                          # 64 value features per patch
# The module LayerNorms x/255.  Doing LN on RAW pixels with eps' = eps*255^2 is
# algebraically identical:  (x-mu_x)/sqrt(var_x + 255^2*eps) == LN(x/255).
LN_EPS_RAW = LN_EPS * 255.0 * 255.0

# packed parameter slab layout (see prepare_params)
_ROW_QK = 0                                   # rows [0,16)  : folded Q/K matrix (16,64)
_ROW_WV = HIDDEN_DIM                          # rows [16,80) : Wv (64,32) in cols [0,32)
_ROW_BV = HIDDEN_DIM + DIM_V                  # row  80      : bv (1,32)  in cols [0,32)
_SLAB_ROWS = ((HIDDEN_DIM + DIM_V + 1 + 7) // 8) * 8   # 88 (sublane aligned)
_SLAB_COLS = DIM_V                            # 64


# ---------------- positional table (same math as the PyTorch code) ------------
def pos_table(n, dim):
    def get_angle(x, h):
        return x / np.power(10000, 2 * (h // 2) / dim)

    tab = np.array([[get_angle(i, j) for j in range(dim)] for i in range(n)]).astype(float)
    tab[:, 0::2] = np.sin(tab[:, 0::2])
    tab[:, 1::2] = np.cos(tab[:, 1::2])
    return tab.astype(np.float32)


# ---------------- fused Pallas kernel ------------------------------------------
def _vision_attention_kernel(xv_ref, p_ref, o_ref):
    """Fused forward on one observation.

    xv_ref: (N, STACK_K*PP)  raw (0..255) patched pixels, frame-major columns.
    p_ref : (_SLAB_ROWS, 64) packed parameters (see prepare_params).
    o_ref : (HIDDEN_DIM, MSG_DIM) output.
    """
    xv = xv_ref[...]                                             # (N, 64) raw pixels

    # ---- attention logits: ONE MXU dot against the raw pixel slab -------------
    # qk already folds (pos_emb @ Wq + bq)/sqrt(msg_dim), Wk, the temporal diff
    # and the /255 scale.  bk and the prev_act contribution are per-query-row
    # constants (identical for every patch) and cancel in the softmax exactly.
    qk = p_ref[_ROW_QK:_ROW_QK + HIDDEN_DIM, :]                  # (16, 64)
    logits = lax.dot_general(qk, xv, (((1,), (1,)), ((), ())),
                             preferred_element_type=jnp.float32)  # (16, N)
    logits = logits - jnp.max(logits, axis=-1, keepdims=True)
    e = jnp.exp(logits)
    attn = e / jnp.sum(e, axis=-1, keepdims=True)                # exact softmax
    # TODO(synk): `mostly_attended_entries` (host-side Python set built from the
    # argmax of `attn`) is a stateful side effect, not part of the returned tensor.

    # ---- per-(patch, frame) input LayerNorm, then ONE V-projection matmul ------
    normed = []
    for f in range(STACK_K):                                     # static, 4 frames
        blk = xv[:, f * PP:(f + 1) * PP]                         # (N, 16)
        mu = jnp.mean(blk, axis=-1, keepdims=True)
        var = jnp.mean((blk - mu) ** 2, axis=-1, keepdims=True)
        normed.append((blk - mu) * lax.rsqrt(var + LN_EPS_RAW))
    xvn = jnp.concatenate(normed, axis=-1)                       # (N, 64)

    wv = p_ref[_ROW_WV:_ROW_WV + DIM_V, 0:MSG_DIM]               # (64, 32)
    bv = p_ref[_ROW_BV:_ROW_BV + 1, 0:MSG_DIM]                   # (1, 32)
    v = jnp.dot(xvn, wv, preferred_element_type=jnp.float32) + bv  # (N, 32)

    # ---- attention readout, ReLU, output LayerNorm -----------------------------
    x = jnp.dot(attn, v, preferred_element_type=jnp.float32)     # (16, 32)
    x = jnp.maximum(x, 0.0)
    mu = jnp.mean(x, axis=-1, keepdims=True)
    var = jnp.mean((x - mu) ** 2, axis=-1, keepdims=True)
    o_ref[...] = (x - mu) * lax.rsqrt(var + LN_EPS)


# ---------------- preprocessing glue (fused into the input DMA) -----------------
def _patch_pixels(obs):
    """(stack_k, H, W) -> (num_patches, stack_k*p*p) raw pixel slab.

    Row j = patch_row*(W/p) + patch_col; column f*p*p + (ph*p + pw) holds
    obs[f, patch_row*p+ph, patch_col*p+pw].  Frame-major, lane-dense: the same
    slab feeds both the K (logit) and V paths in-kernel.
    """
    k, h, w = obs.shape
    p = PATCH_SIZE
    x = obs.astype(jnp.float32)                                  # raw 0..255 (no /255)
    x = jnp.transpose(x, (1, 2, 0))                              # (H, W, k)
    x = x.reshape(h // p, p, w // p, p, k)
    x = jnp.transpose(x, (0, 2, 4, 1, 3))                        # (hp, wp, k, p, p)
    return x.reshape((h // p) * (w // p), k * p * p)


def vision_attention_neuron_forward(obs, prev_act, packed_params):
    """Forward pass.  `prev_act` is accepted for interface parity with the PyTorch
    module, but it is broadcast to every patch there, so its logit contribution is a
    per-query constant that cancels exactly in the softmax -> unused by the kernel."""
    del prev_act
    xv = _patch_pixels(obs)
    # TODO(synk): for a batch of observations, add a leading batch grid axis with
    # dimension_semantics=("parallel",) (uses v7x's 2nd TensorCore) and stack the
    # batch so the output's last dim is a multiple of 128 lanes.
    return pl.pallas_call(
        _vision_attention_kernel,
        out_shape=jax.ShapeDtypeStruct((HIDDEN_DIM, MSG_DIM), jnp.float32),
        in_specs=[pl.BlockSpec(memory_space=pltpu.MemorySpace.VMEM),
                  pl.BlockSpec(memory_space=pltpu.MemorySpace.VMEM)],
        out_specs=pl.BlockSpec(memory_space=pltpu.MemorySpace.VMEM),
        compiler_params=pltpu.CompilerParams(
            # let XLA fuse the patch transpose/reshape producers into the xv input
            # instead of materializing the slab in HBM
            allow_input_fusion=[True, False]),
    )(xv, packed_params)


# ---------------- one-time host-side parameter folding --------------------------
def prepare_params(params, pos_emb):
    """Fold all parameter-only work (float64 on host) into a single VMEM slab."""
    f64 = np.float64
    wq = np.asarray(params["wq"], f64)
    bq = np.asarray(params["bq"], f64)
    wk = np.asarray(params["wk"], f64)
    wv = np.asarray(params["wv"], f64)
    bv = np.asarray(params["bv"], f64)
    pe = np.asarray(pos_emb, f64)

    # q = (pos_emb @ Wq + bq) / sqrt(msg_dim): parameter-only, precomputed.
    q = (pe @ wq + bq) / np.sqrt(MSG_DIM)                        # (16, 32)

    # Fold Wk's diff-pixel rows into the query.  The module flattens x_k patches
    # as (ph, pw, frame) with frame fastest -> Wk row index = pixel*(k-1) + frame.
    a = q @ wk[:(STACK_K - 1) * PP, :].T                         # (16, 48) interleaved
    a = a.reshape(HIDDEN_DIM, PP, STACK_K - 1).transpose(0, 2, 1)  # (16, k-1, PP)

    # Telescope the temporal diff (x_{f+1} - x_f) into per-raw-frame coefficients
    # and fold the /255 scaling, so the kernel dots directly against raw pixels.
    b = np.zeros((HIDDEN_DIM, STACK_K, PP), f64)
    b[:, 1:, :] += a
    b[:, :-1, :] -= a
    b = b.reshape(HIDDEN_DIM, STACK_K * PP) / 255.0              # (16, 64)
    # bk and the prev_act rows of Wk add a per-query-row constant to every patch's
    # logit, which the softmax is invariant to -> dropped exactly.

    slab = np.zeros((_SLAB_ROWS, _SLAB_COLS), np.float32)
    slab[_ROW_QK:_ROW_QK + HIDDEN_DIM, :] = b
    slab[_ROW_WV:_ROW_WV + DIM_V, :MSG_DIM] = wv
    slab[_ROW_BV, :MSG_DIM] = bv[0]
    return jnp.asarray(slab)


# ---------------- faithful float64 numpy reference (backend independent) --------
def reference_forward(obs, prev_act, params, pos_emb):
    f64 = np.float64
    obs = np.asarray(obs, f64)
    prev_act = np.asarray(prev_act, f64)
    p = PATCH_SIZE
    k, h, w = obs.shape
    n = (h // p) * (w // p)

    def get_patches(x):                                          # (H,W,C) -> (n,p,p,C)
        hh, ww, c = x.shape
        x = x.reshape(hh // p, p, ww // p, p, c).transpose(0, 2, 1, 3, 4)
        return x.reshape(-1, p, p, c)

    def layer_norm(x):
        mu = x.mean(-1, keepdims=True)
        var = ((x - mu) ** 2).mean(-1, keepdims=True)
        return (x - mu) / np.sqrt(var + LN_EPS)

    x_obs = obs / 255.0
    x_k = np.diff(x_obs, axis=0).transpose(1, 2, 0)              # (H, W, k-1)
    x_k = get_patches(x_k).reshape(n, -1)                        # (n, 48)
    x_k = np.concatenate([x_k, np.repeat(prev_act, n, axis=0)], axis=-1)   # (n, 51)

    x_v = get_patches(x_obs.transpose(1, 2, 0))                  # (n, p, p, k)
    x_v = x_v.transpose(0, 3, 1, 2).reshape(n, k, p * p)
    x_v = layer_norm(x_v).reshape(n, -1)                         # (n, 64)

    q = np.asarray(pos_emb, f64) @ np.asarray(params["wq"], f64) + np.asarray(params["bq"], f64)
    kk = x_k @ np.asarray(params["wk"], f64) + np.asarray(params["bk"], f64)
    v = x_v @ np.asarray(params["wv"], f64) + np.asarray(params["bv"], f64)

    logits = (q @ kk.T) / np.sqrt(MSG_DIM)
    logits = logits - logits.max(-1, keepdims=True)
    e = np.exp(logits)
    attn = e / e.sum(-1, keepdims=True)
    return layer_norm(np.maximum(attn @ v, 0.0))


# ---------------- deterministic parameter init ----------------------------------
def init_params(key):
    ks = jax.random.split(key, 6)

    def lin(kw, kb, din, dout):
        w = jax.random.normal(kw, (din, dout), jnp.float32) * 0.1   # == torch W.T
        b = jax.random.normal(kb, (1, dout), jnp.float32) * 0.1
        return w, b

    wq, bq = lin(ks[0], ks[1], POS_EM_DIM, MSG_DIM)
    wk, bk = lin(ks[2], ks[3], DIM_K, MSG_DIM)
    wv, bv = lin(ks[4], ks[5], DIM_V, MSG_DIM)
    return dict(wq=wq, bq=bq, wk=wk, bk=bk, wv=wv, bv=bv)


if __name__ == "__main__":
    key = jax.random.PRNGKey(0)
    k_obs, k_act, k_par = jax.random.split(key, 3)

    H = W = 16                                    # -> num_patches = (16/4)*(16/4) = 16
    obs = jax.random.uniform(k_obs, (STACK_K, H, W), jnp.float32, 0.0, 255.0)
    prev_act = jax.random.normal(k_act, (1, ACT_DIM), jnp.float32)
    params = init_params(k_par)
    pos_emb = pos_table(HIDDEN_DIM, POS_EM_DIM)

    packed = prepare_params(params, pos_emb)      # once per parameter set
    fwd = jax.jit(vision_attention_neuron_forward)

    out = jax.block_until_ready(fwd(obs, prev_act, packed))
    ref = reference_forward(np.asarray(obs), np.asarray(prev_act),
                            {name: np.asarray(val) for name, val in params.items()},
                            pos_emb)

    assert out.shape == (HIDDEN_DIM, MSG_DIM), out.shape
    err = float(np.max(np.abs(np.asarray(out, np.float64) - ref)))
    # Outputs are LayerNorm'ed (unit variance); 5e-3 covers f32/MXU rounding of the
    # kernel against the float64 host reference (a wrong kernel is off by O(1)).
    assert err < 5e-3, f"max abs error {err}"
    print("KERNEL_OK")
</pallas_src>

<mosaic_0001>
module attributes {stable_mosaic.version = 11 : i64} {
  func.func @_vision_attention_kernel(%arg0: memref<16x64xf32, #tpu.memory_space<vmem>>, %arg1: memref<88x64xf32, #tpu.memory_space<vmem>>, %arg2: memref<16x32xf32, #tpu.memory_space<vmem>>) attributes {dimension_semantics = [], scalar_prefetch = 0 : i64, scratch_operands = 0 : i64, tpu.core_type = #tpu.core_type<tc>} {
    %c0 = arith.constant 0 : index
    %c0_0 = arith.constant 0 : index
    %0 = vector.load %arg0[%c0, %c0_0] : memref<16x64xf32, #tpu.memory_space<vmem>>, vector<16x64xf32>
    %c0_1 = arith.constant 0 : index
    %c0_2 = arith.constant 0 : index
    %1 = vector.load %arg1[%c0_1, %c0_2] : memref<88x64xf32, #tpu.memory_space<vmem>>, vector<16x64xf32>
    %cst = arith.constant dense<0.000000e+00> : vector<16x16xf32>
    %2 = tpu.matmul %1, %0, %cst {dimension_numbers = #tpu.dot_dimension_numbers<[1], [1], [0], [0], [0, 0, 1, 0], [], []>} : vector<16x64xf32>, vector<16x64xf32>, vector<16x16xf32> -> vector<16x16xf32>
    %cst_3 = arith.constant dense<0xFF800000> : vector<16xf32>
    %3 = vector.multi_reduction <maximumf>, %2, %cst_3 [1] : vector<16x16xf32> to vector<16xf32>
    %4 = vector.shape_cast %3 : vector<16xf32> to vector<16x1xf32>
    %5 = vector.broadcast %4 : vector<16x1xf32> to vector<16x16xf32>
    %6 = arith.subf %2, %5 : vector<16x16xf32>
    %7 = math.exp %6 : vector<16x16xf32>
    %cst_4 = arith.constant dense<0.000000e+00> : vector<16xf32>
    %8 = vector.multi_reduction <add>, %7, %cst_4 [1] : vector<16x16xf32> to vector<16xf32>
    %9 = vector.shape_cast %8 : vector<16xf32> to vector<16x1xf32>
    %10 = vector.broadcast %9 : vector<16x1xf32> to vector<16x16xf32>
    %11 = arith.divf %7, %10 : vector<16x16xf32>
    %12 = vector.extract_strided_slice %0 {offsets = [0, 0], sizes = [16, 16], strides = [1, 1]} : vector<16x64xf32> to vector<16x16xf32>
    %cst_5 = arith.constant dense<0.000000e+00> : vector<16xf32>
    %13 = vector.multi_reduction <add>, %12, %cst_5 [1] : vector<16x16xf32> to vector<16xf32>
    %14 = vector.shape_cast %13 : vector<16xf32> to vector<16x1xf32>
    %cst_6 = arith.constant 1.600000e+01 : f32
    %15 = vector.broadcast %cst_6 : f32 to vector<16x1xf32>
    %16 = arith.divf %14, %15 : vector<16x1xf32>
    %17 = vector.broadcast %16 : vector<16x1xf32> to vector<16x16xf32>
    %18 = arith.subf %12, %17 : vector<16x16xf32>
    %19 = arith.mulf %18, %18 : vector<16x16xf32>
    %cst_7 = arith.constant dense<0.000000e+00> : vector<16xf32>
    %20 = vector.multi_reduction <add>, %19, %cst_7 [1] : vector<16x16xf32> to vector<16xf32>
    %21 = vector.shape_cast %20 : vector<16xf32> to vector<16x1xf32>
    %cst_8 = arith.constant 1.600000e+01 : f32
    %22 = vector.broadcast %cst_8 : f32 to vector<16x1xf32>
    %23 = arith.divf %21, %22 : vector<16x1xf32>
    %24 = vector.broadcast %16 : vector<16x1xf32> to vector<16x16xf32>
    %25 = arith.subf %12, %24 : vector<16x16xf32>
    %cst_9 = arith.constant 6.502500e-01 : f32
    %26 = vector.broadcast %cst_9 : f32 to vector<16x1xf32>
    %27 = arith.addf %23, %26 : vector<16x1xf32>
    %28 = math.rsqrt %27 : vector<16x1xf32>
    %29 = vector.broadcast %28 : vector<16x1xf32> to vector<16x16xf32>
    %30 = arith.mulf %25, %29 : vector<16x16xf32>
    %31 = vector.extract_strided_slice %0 {offsets = [0, 16], sizes = [16, 16], strides = [1, 1]} : vector<16x64xf32> to vector<16x16xf32>
    %cst_10 = arith.constant dense<0.000000e+00> : vector<16xf32>
    %32 = vector.multi_reduction <add>, %31, %cst_10 [1] : vector<16x16xf32> to vector<16xf32>
    %33 = vector.shape_cast %32 : vector<16xf32> to vector<16x1xf32>
    %cst_11 = arith.constant 1.600000e+01 : f32
    %34 = vector.broadcast %cst_11 : f32 to vector<16x1xf32>
    %35 = arith.divf %33, %34 : vector<16x1xf32>
    %36 = vector.broadcast %35 : vector<16x1xf32> to vector<16x16xf32>
    %37 = arith.subf %31, %36 : vector<16x16xf32>
    %38 = arith.mulf %37, %37 : vector<16x16xf32>
    %cst_12 = arith.constant dense<0.000000e+00> : vector<16xf32>
    %39 = vector.multi_reduction <add>, %38, %cst_12 [1] : vector<16x16xf32> to vector<16xf32>
    %40 = vector.shape_cast %39 : vector<16xf32> to vector<16x1xf32>
    %cst_13 = arith.constant 1.600000e+01 : f32
    %41 = vector.broadcast %cst_13 : f32 to vector<16x1xf32>
    %42 = arith.divf %40, %41 : vector<16x1xf32>
    %43 = vector.broadcast %35 : vector<16x1xf32> to vector<16x16xf32>
    %44 = arith.subf %31, %43 : vector<16x16xf32>
    %cst_14 = arith.constant 6.502500e-01 : f32
    %45 = vector.broadcast %cst_14 : f32 to vector<16x1xf32>
    %46 = arith.addf %42, %45 : vector<16x1xf32>
    %47 = math.rsqrt %46 : vector<16x1xf32>
    %48 = vector.broadcast %47 : vector<16x1xf32> to vector<16x16xf32>
    %49 = arith.mulf %44, %48 : vector<16x16xf32>
    %50 = vector.extract_strided_slice %0 {offsets = [0, 32], sizes = [16, 16], strides = [1, 1]} : vector<16x64xf32> to vector<16x16xf32>
    %cst_15 = arith.constant dense<0.000000e+00> : vector<16xf32>
    %51 = vector.multi_reduction <add>, %50, %cst_15 [1] : vector<16x16xf32> to vector<16xf32>
    %52 = vector.shape_cast %51 : vector<16xf32> to vector<16x1xf32>
    %cst_16 = arith.constant 1.600000e+01 : f32
    %53 = vector.broadcast %cst_16 : f32 to vector<16x1xf32>
    %54 = arith.divf %52, %53 : vector<16x1xf32>
    %55 = vector.broadcast %54 : vector<16x1xf32> to vector<16x16xf32>
    %56 = arith.subf %50, %55 : vector<16x16xf32>
    %57 = arith.mulf %56, %56 : vector<16x16xf32>
    %cst_17 = arith.constant dense<0.000000e+00> : vector<16xf32>
    %58 = vector.multi_reduction <add>, %57, %cst_17 [1] : vector<16x16xf32> to vector<16xf32>
    %59 = vector.shape_cast %58 : vector<16xf32> to vector<16x1xf32>
    %cst_18 = arith.constant 1.600000e+01 : f32
    %60 = vector.broadcast %cst_18 : f32 to vector<16x1xf32>
    %61 = arith.divf %59, %60 : vector<16x1xf32>
    %62 = vector.broadcast %54 : vector<16x1xf32> to vector<16x16xf32>
    %63 = arith.subf %50, %62 : vector<16x16xf32>
    %cst_19 = arith.constant 6.502500e-01 : f32
    %64 = vector.broadcast %cst_19 : f32 to vector<16x1xf32>
    %65 = arith.addf %61, %64 : vector<16x1xf32>
    %66 = math.rsqrt %65 : vector<16x1xf32>
    %67 = vector.broadcast %66 : vector<16x1xf32> to vector<16x16xf32>
    %68 = arith.mulf %63, %67 : vector<16x16xf32>
    %69 = vector.extract_strided_slice %0 {offsets = [0, 48], sizes = [16, 16], strides = [1, 1]} : vector<16x64xf32> to vector<16x16xf32>
    %cst_20 = arith.constant dense<0.000000e+00> : vector<16xf32>
    %70 = vector.multi_reduction <add>, %69, %cst_20 [1] : vector<16x16xf32> to vector<16xf32>
    %71 = vector.shape_cast %70 : vector<16xf32> to vector<16x1xf32>
    %cst_21 = arith.constant 1.600000e+01 : f32
    %72 = vector.broadcast %cst_21 : f32 to vector<16x1xf32>
    %73 = arith.divf %71, %72 : vector<16x1xf32>
    %74 = vector.broadcast %73 : vector<16x1xf32> to vector<16x16xf32>
    %75 = arith.subf %69, %74 : vector<16x16xf32>
    %76 = arith.mulf %75, %75 : vector<16x16xf32>
    %cst_22 = arith.constant dense<0.000000e+00> : vector<16xf32>
    %77 = vector.multi_reduction <add>, %76, %cst_22 [1] : vector<16x16xf32> to vector<16xf32>
    %78 = vector.shape_cast %77 : vector<16xf32> to vector<16x1xf32>
    %cst_23 = arith.constant 1.600000e+01 : f32
    %79 = vector.broadcast %cst_23 : f32 to vector<16x1xf32>
    %80 = arith.divf %78, %79 : vector<16x1xf32>
    %81 = vector.broadcast %73 : vector<16x1xf32> to vector<16x16xf32>
    %82 = arith.subf %69, %81 : vector<16x16xf32>
    %cst_24 = arith.constant 6.502500e-01 : f32
    %83 = vector.broadcast %cst_24 : f32 to vector<16x1xf32>
    %84 = arith.addf %80, %83 : vector<16x1xf32>
    %85 = math.rsqrt %84 : vector<16x1xf32>
    %86 = vector.broadcast %85 : vector<16x1xf32> to vector<16x16xf32>
    %87 = arith.mulf %82, %86 : vector<16x16xf32>
    %88 = tpu.concatenate %30, %49, %68, %87 in 1 : vector<16x16xf32>, vector<16x16xf32>, vector<16x16xf32>, vector<16x16xf32> -> vector<16x64xf32>
    %c16 = arith.constant 16 : index
    %c0_25 = arith.constant 0 : index
    %89 = vector.load %arg1[%c16, %c0_25] : memref<88x64xf32, #tpu.memory_space<vmem>>, vector<64x32xf32>
    %c80 = arith.constant 80 : index
    %c0_26 = arith.constant 0 : index
    %90 = vector.load %arg1[%c80, %c0_26] : memref<88x64xf32, #tpu.memory_space<vmem>>, vector<1x32xf32>
    %cst_27 = arith.constant dense<0.000000e+00> : vector<16x32xf32>
    %91 = tpu.matmul %88, %89, %cst_27 {dimension_numbers = #tpu.dot_dimension_numbers<[1], [0], [0], [1], [0, 0, 1, 1], [], []>} : vector<16x64xf32>, vector<64x32xf32>, vector<16x32xf32> -> vector<16x32xf32>
    %92 = vector.broadcast %90 : vector<1x32xf32> to vector<16x32xf32>
    %93 = arith.addf %91, %92 : vector<16x32xf32>
    %cst_28 = arith.constant dense<0.000000e+00> : vector<16x32xf32>
    %94 = tpu.matmul %11, %93, %cst_28 {dimension_numbers = #tpu.dot_dimension_numbers<[1], [0], [0], [1], [0, 0, 1, 1], [], []>} : vector<16x16xf32>, vector<16x32xf32>, vector<16x32xf32> -> vector<16x32xf32>
    %cst_29 = arith.constant 0.000000e+00 : f32
    %95 = vector.broadcast %cst_29 : f32 to vector<16x32xf32>
    %96 = arith.maximumf %94, %95 : vector<16x32xf32>
    %cst_30 = arith.constant dense<0.000000e+00> : vector<16xf32>
    %97 = vector.multi_reduction <add>, %96, %cst_30 [1] : vector<16x32xf32> to vector<16xf32>
    %98 = vector.shape_cast %97 : vector<16xf32> to vector<16x1xf32>
    %cst_31 = arith.constant 3.200000e+01 : f32
    %99 = vector.broadcast %cst_31 : f32 to vector<16x1xf32>
    %100 = arith.divf %98, %99 : vector<16x1xf32>
    %101 = vector.broadcast %100 : vector<16x1xf32> to vector<16x32xf32>
    %102 = arith.subf %96, %101 : vector<16x32xf32>
    %103 = arith.mulf %102, %102 : vector<16x32xf32>
    %cst_32 = arith.constant dense<0.000000e+00> : vector<16xf32>
    %104 = vector.multi_reduction <add>, %103, %cst_32 [1] : vector<16x32xf32> to vector<16xf32>
    %105 = vector.shape_cast %104 : vector<16xf32> to vector<16x1xf32>
    %cst_33 = arith.constant 3.200000e+01 : f32
    %106 = vector.broadcast %cst_33 : f32 to vector<16x1xf32>
    %107 = arith.divf %105, %106 : vector<16x1xf32>
    %108 = vector.broadcast %100 : vector<16x1xf32> to vector<16x32xf32>
    %109 = arith.subf %96, %108 : vector<16x32xf32>
    %cst_34 = arith.constant 9.99999974E-6 : f32
    %110 = vector.broadcast %cst_34 : f32 to vector<16x1xf32>
    %111 = arith.addf %107, %110 : vector<16x1xf32>
    %112 = math.rsqrt %111 : vector<16x1xf32>
    %113 = vector.broadcast %112 : vector<16x1xf32> to vector<16x32xf32>
    %114 = arith.mulf %109, %113 : vector<16x32xf32>
    %c0_35 = arith.constant 0 : index
    %c0_36 = arith.constant 0 : index
    %115 = vector.load %arg2[%c0_35, %c0_36] : memref<16x32xf32, #tpu.memory_space<vmem>>, vector<16x32xf32>
    tpu.vector_store %arg2[%c0_35, %c0_36], %114 {strides = array<i32>} : memref<16x32xf32, #tpu.memory_space<vmem>>, vector<16x32xf32>,
    return
  }
}

</mosaic_0001>

<llo_original>
// kernel: vision_attention_neuron_forward.1
$region0: #{vision_attention_neuron_forward.1}
  #allocation0 [shape = 'u32[]', space=smem, size = 0x4, offset = 0x4, fixed_abs, tag = 'smem constant byte address 0x4 - core index']
  #allocation1 [shape = 'u32[144,128]{1,0:T(1,128)}', space=vmem, size = 0x12000, scoped, tag = 'internal scratch']
  %s0 = inlined_call_operand.vmem [shape: f32[16,64], index: 0, kind: input, shape index: {}]
  %s1 = inlined_call_operand.vmem [shape: f32[88,64], index: 1, kind: input, shape index: {}]
  %s2 = inlined_call_operand.hbm [shape: f32[16,32], index: 2, kind: output, shape index: {}]
  %s3 = sld [smem:[#allocation0]]
  $region18: #{vision_attention_neuron_forward.1} parent=0
    _
  %s5 = ssub.s32 1, %s3
  %s6 = scalar_select 0, %s5, %s3
  $region1: #{vision_attention_neuron_forward.1} parent=0
    #allocation2 [shape = 'u8[8192]{0}', space=vmem, size = 0x2000, scoped, tag = 'output window, operand 0, single buffered']
    #allocation3 [shape = 's32[1]{0}', space=sflag, size = 0x4, scoped, tag = 'scoped memory for vision_attention_neuron_forward.1']
    %7 = vsyncpa [#allocation3], 0
    // Predicated region
    $region2: #{vision_attention_neuron_forward.1} parent=1 // pred_check
      _
    $region3: #{vision_attention_neuron_forward.1} parent=1 // pred_check_branch
      %9 = sbr.rel (0) target = $region5
    $region4: #{vision_attention_neuron_forward.1} parent=1 // pred_region
      _
    $region5: #{vision_attention_neuron_forward.1} parent=1 // pred_fallthru
      _
    // Predicated region
    $region6: #{vision_attention_neuron_forward.1} parent=1 // pred_check
      _
    $region7: #{vision_attention_neuron_forward.1} parent=1 // pred_check_branch
      %11 = sbr.rel (0) target = $region9
    $region8: #{vision_attention_neuron_forward.1} parent=1 // pred_region
      _
    $region9: #{vision_attention_neuron_forward.1} parent=1 // pred_fallthru
      _
    %v12 = vld [vmem:[%s0] sm:$0xff]
    %v13 = vld [vmem:[%s0 + $0x8] sm:$0xff]
    %v14 = vld [vmem:[%s1] sm:$0xff]
    %v15 = vld [vmem:[%s1 + $0x8] sm:$0xff]
    %vm16 = vcmask 523264
    %v18 = vsel %vm16, %v14, 0
    %v21 = vsel %vm16, %v15, 0
    %v24 = vsel %vm16, %v12, 0
    %v27 = vsel %vm16, %v13, 0
    %29 = vmatprep.subr.mxu0 0.0
    %30 = vmatpush1.xpose.msra.mxu0 %v24
    %31 = vmatprep.subr.mxu0 0.0
    %32 = vmatpush1.xpose.msra.mxu0 %v27
    %33 = vmatprep.subr.mxu0 0.0
    %34 = vmatpush1.xpose.msra.mxu0 0.0
    %35 = vmatprep.subr.mxu0 0.0
    %36 = vmatpush1.xpose.msra.mxu0 0.0
    %37 = vmatprep.subr.mxu0 0.0
    %38 = vmatpush1.xpose.msra.mxu0 0.0
    %39 = vmatprep.subr.mxu0 0.0
    %40 = vmatpush1.xpose.msra.mxu0 0.0
    %41 = vmatprep.subr.mxu0 0.0
    %42 = vmatpush1.xpose.msra.mxu0 0.0
    %43 = vmatprep.subr.mxu0 0.0
    %44 = vmatpush1.xpose.msra.mxu0 0.0
    %45 = vmatprep.subr.mxu0 0.0
    %46 = vmatpush1.xpose.msra.mxu0 0.0
    %47 = vmatprep.subr.mxu0 0.0
    %48 = vmatpush1.xpose.msra.mxu0 0.0
    %49 = vmatprep.subr.mxu0 0.0
    %50 = vmatpush1.xpose.msra.mxu0 0.0
    %51 = vmatprep.subr.mxu0 0.0
    %52 = vmatpush1.xpose.msra.mxu0 0.0
    %53 = vmatprep.subr.mxu0 0.0
    %54 = vmatpush1.xpose.msra.mxu0 0.0
    %55 = vmatprep.subr.mxu0 0.0
    %56 = vmatpush1.xpose.msra.mxu0 0.0
    %57 = vmatprep.subr.mxu0 0.0
    %58 = vmatpush1.xpose.msra.mxu0 0.0
    %59 = vmatprep.subr.mxu0 0.0
    %60 = vmatpush1.xpose.msra.mxu0 0.0
    %61 = vmatprep.subr.mxu0 0.0
    %62 = vmatpush1.xpose.msra.mxu0 0.0
    %63 = vmatprep.subr.mxu0 0.0
    %64 = vmatpush1.xpose.msra.mxu0 0.0
    %65 = vmatprep.subr.mxu0 0.0
    %66 = vmatpush1.xpose.msra.mxu0 0.0
    %67 = vmatprep.subr.mxu0 0.0
    %68 = vmatpush1.xpose.msra.mxu0 0.0
    %69 = vmatprep.subr.mxu0 0.0
    %70 = vmatpush1.xpose.msra.mxu0 0.0
    %71 = vmatprep.subr.mxu0 0.0
    %72 = vmatpush1.xpose.msra.mxu0 0.0
    %73 = vmatprep.subr.mxu0 0.0
    %74 = vmatpush1.xpose.msra.mxu0 0.0
    %75 = vmatprep.subr.mxu0 0.0
    %76 = vmatpush1.xpose.msra.mxu0 0.0
    %77 = vmatprep.subr.mxu0 0.0
    %78 = vmatpush1.xpose.msra.mxu0 0.0
    %79 = vmatprep.subr.mxu0 0.0
    %80 = vmatpush1.xpose.msra.mxu0 0.0
    %81 = vmatprep.subr.mxu0 0.0
    %82 = vmatpush1.xpose.msra.mxu0 0.0
    %83 = vmatprep.subr.mxu0 0.0
    %84 = vmatpush1.xpose.msra.mxu0 0.0
    %85 = vmatprep.subr.mxu0 0.0
    %86 = vmatpush1.xpose.msra.mxu0 0.0
    %87 = vmatprep.subr.mxu0 0.0
    %88 = vmatpush1.xpose.msra.mxu0 0.0
    %89 = vmatprep.subr.mxu0 0.0
    %90 = vmatpush1.xpose.msra.mxu0 0.0
    %91 = vmatprep.subr.mxu0 0.0
    %92 = vmatpush1.xpose.msra.mxu0 0.0
    %93 = vmatprep.mubr.f32.mxu0 0.0
    %94 = vmatmul.mubr.f32.gmra.mrb[0].mxu0 %v18
    %v95 = vpop.f32.mrb[0].mxu0
    %v96 = vadd.f32 0.0, %v95
    %v97 = vpop.f32.mrb[0].mxu0
    %98 = vmatprep.mubr.f32.mxu0 0.0
    %99 = vmatmul.mubr.f32.gmra.mrb[0].mxu0 %v21
    %v100 = vpop.f32.mrb[0].mxu0
    %v101 = vadd.f32 0.0, %v100
    %v102 = vpop.f32.mrb[0].mxu0
    %103 = vdwg.mxu0
    %vm104 = vcmask 130048
    %v105 = vsel %vm104, %v96, -inf
    %106 = vmax.xlane.f32.xlu0 %v105
    %v107 = vpop.xlane.xlu0 %106
    %v108 = vsel %vm104, %v101, -inf
    %109 = vmax.xlane.f32.xlu0 %v108
    %v110 = vpop.xlane.xlu0 %109
    %v111 = vsub.f32 %v96, %v107
    %v112 = vsub.f32 %v101, %v110
    %v113 = vmul.f32 %v111, 1.442695
    %v114 = vpow.pop %v113
    %v115 = vmul.f32 %v112, 1.442695
    %v116 = vpow.pop %v115
    %v117 = vsel %vm104, %v114, 0.0
    %118 = vadd.xlane.f32.xlu0 %v117
    %v119 = vpop.xlane.xlu0 %118
    %v120 = vsel %vm104, %v116, 0.0
    %121 = vadd.xlane.f32.xlu0 %v120
    %v122 = vpop.xlane.xlu0 %121
    %v123 = vrcp.pop %v119
    %v124 = vmul.f32 %v114, %v123
    %v125 = vrcp.pop %v122
    %v126 = vmul.f32 %v116, %v125
    %v127 = vsel %vm104, %v12, 0.0
    %128 = vadd.xlane.f32.xlu0 %v127
    %v129 = vpop.xlane.xlu0 %128
    %v130 = vsel %vm104, %v13, 0.0
    %131 = vadd.xlane.f32.xlu0 %v130
    %v132 = vpop.xlane.xlu0 %131
    %v133 = vrcp.pop 16.0
    %v134 = vmul.f32 %v129, %v133
    %v135 = vmul.f32 %v132, %v133
    %v136 = vsub.f32 %v12, %v134
    %v137 = vsub.f32 %v13, %v135
    %v138 = vmul.f32 %v136, %v136
    %v139 = vmul.f32 %v137, %v137
    %v140 = vsel %vm104, %v138, 0.0
    %141 = vadd.xlane.f32.xlu0 %v140
    %v142 = vpop.xlane.xlu0 %141
    %v143 = vsel %vm104, %v139, 0.0
    %144 = vadd.xlane.f32.xlu0 %v143
    %v145 = vpop.xlane.xlu0 %144
    %v146 = vmul.f32 %v142, %v133
    %v147 = vmul.f32 %v145, %v133
    %v148 = vadd.f32 %v146, 0.65025
    %v149 = vadd.f32 %v147, 0.65025
    %v150 = vrsqrt.pop %v148
    %v151 = vrsqrt.pop %v149
    %v152 = vmul.f32 %v136, %v150
    %v153 = vmul.f32 %v137, %v151
    %154 = vrot.lane.b32.xlu0 %v12, 112
    %v155 = vpop.permute.xlu0 %154
    %156 = vrot.lane.b32.xlu0 %v13, 112
    %v157 = vpop.permute.xlu0 %156
    %v160 = vsel %vm104, %v155, 0.0
    %161 = vadd.xlane.f32.xlu0 %v160
    %v162 = vpop.xlane.xlu0 %161
    %v163 = vsel %vm104, %v157, 0.0
    %164 = vadd.xlane.f32.xlu0 %v163
    %v165 = vpop.xlane.xlu0 %164
    %v166 = vmul.f32 %v162, %v133
    %v167 = vmul.f32 %v165, %v133
    %v168 = vsub.f32 %v12, %v166
    %v169 = vsub.f32 %v13, %v167
    %v170 = vmul.f32 %v168, %v168
    %v171 = vmul.f32 %v169, %v169
    %174 = vrot.lane.b32.xlu0 %v170, 112
    %v175 = vpop.permute.xlu0 %174
    %176 = vrot.lane.b32.xlu0 %v171, 112
    %v177 = vpop.permute.xlu0 %176
    %v180 = vsel %vm104, %v175, 0.0
    %181 = vadd.xlane.f32.xlu0 %v180
    %v182 = vpop.xlane.xlu0 %181
    %v183 = vsel %vm104, %v177, 0.0
    %184 = vadd.xlane.f32.xlu0 %v183
    %v185 = vpop.xlane.xlu0 %184
    %v186 = vmul.f32 %v182, %v133
    %v187 = vmul.f32 %v185, %v133
    %v188 = vadd.f32 %v186, 0.65025
    %v189 = vadd.f32 %v187, 0.65025
    %v190 = vrsqrt.pop %v188
    %v191 = vrsqrt.pop %v189
    %v192 = vmul.f32 %v168, %v190
    %v193 = vmul.f32 %v169, %v191
    %194 = vrot.lane.b32.xlu0 %v12, 96
    %v195 = vpop.permute.xlu0 %194
    %196 = vrot.lane.b32.xlu0 %v13, 96
    %v197 = vpop.permute.xlu0 %196
    %v200 = vsel %vm104, %v195, 0.0
    %201 = vadd.xlane.f32.xlu0 %v200
    %v202 = vpop.xlane.xlu0 %201
    %v203 = vsel %vm104, %v197, 0.0
    %204 = vadd.xlane.f32.xlu0 %v203
    %v205 = vpop.xlane.xlu0 %204
    %v206 = vmul.f32 %v202, %v133
    %v207 = vmul.f32 %v205, %v133
    %v208 = vsub.f32 %v12, %v206
    %v209 = vsub.f32 %v13, %v207
    %v210 = vmul.f32 %v208, %v208
    %v211 = vmul.f32 %v209, %v209
    %214 = vrot.lane.b32.xlu0 %v210, 96
    %v215 = vpop.permute.xlu0 %214
    %216 = vrot.lane.b32.xlu0 %v211, 96
    %v217 = vpop.permute.xlu0 %216
    %v220 = vsel %vm104, %v215, 0.0
    %221 = vadd.xlane.f32.xlu0 %v220
    %v222 = vpop.xlane.xlu0 %221
    %v223 = vsel %vm104, %v217, 0.0
    %224 = vadd.xlane.f32.xlu0 %v223
    %v225 = vpop.xlane.xlu0 %224
    %v226 = vmul.f32 %v222, %v133
    %v227 = vmul.f32 %v225, %v133
    %v228 = vadd.f32 %v226, 0.65025
    %v229 = vadd.f32 %v227, 0.65025
    %v230 = vrsqrt.pop %v228
    %v231 = vrsqrt.pop %v229
    %v232 = vmul.f32 %v208, %v230
    %v233 = vmul.f32 %v209, %v231
    %234 = vrot.lane.b32.xlu0 %v12, 80
    %v235 = vpop.permute.xlu0 %234
    %236 = vrot.lane.b32.xlu0 %v13, 80
    %v237 = vpop.permute.xlu0 %236
    %v240 = vsel %vm104, %v235, 0.0
    %241 = vadd.xlane.f32.xlu0 %v240
    %v242 = vpop.xlane.xlu0 %241
    %v243 = vsel %vm104, %v237, 0.0
    %244 = vadd.xlane.f32.xlu0 %v243
    %v245 = vpop.xlane.xlu0 %244
    %v246 = vmul.f32 %v242, %v133
    %v247 = vmul.f32 %v245, %v133
    %v248 = vsub.f32 %v12, %v246
    %v249 = vsub.f32 %v13, %v247
    %v250 = vmul.f32 %v248, %v248
    %v251 = vmul.f32 %v249, %v249
    %254 = vrot.lane.b32.xlu0 %v250, 80
    %v255 = vpop.permute.xlu0 %254
    %256 = vrot.lane.b32.xlu0 %v251, 80
    %v257 = vpop.permute.xlu0 %256
    %v260 = vsel %vm104, %v255, 0.0
    %261 = vadd.xlane.f32.xlu0 %v260
    %v262 = vpop.xlane.xlu0 %261
    %v263 = vsel %vm104, %v257, 0.0
    %264 = vadd.xlane.f32.xlu0 %v263
    %v265 = vpop.xlane.xlu0 %264
    %v266 = vmul.f32 %v262, %v133
    %v267 = vmul.f32 %v265, %v133
    %v268 = vadd.f32 %v266, 0.65025
    %v269 = vadd.f32 %v267, 0.65025
    %v270 = vrsqrt.pop %v268
    %v271 = vrsqrt.pop %v269
    %v272 = vmul.f32 %v248, %v270
    %v273 = vmul.f32 %v249, %v271
    %v274 = vsel %vm104, %v152, %v192
    %v275 = vsel %vm104, %v153, %v193
    %vm276 = vcmask 261120
    %v277 = vsel %vm276, %v274, %v232
    %v278 = vsel %vm276, %v275, %v233
    %vm279 = vcmask 392192
    %v280 = vsel %vm279, %v277, %v272
    %v281 = vsel %vm279, %v278, %v273
    %v282 = vld [vmem:[%s1 + $0x10] sm:$0xff]
    %v283 = vld [vmem:[%s1 + $0x18] sm:$0xff]
    %v284 = vld [vmem:[%s1 + $0x20] sm:$0xff]
    %v285 = vld [vmem:[%s1 + $0x28] sm:$0xff]
    %v286 = vld [vmem:[%s1 + $0x30] sm:$0xff]
    %v287 = vld [vmem:[%s1 + $0x38] sm:$0xff]
    %v288 = vld [vmem:[%s1 + $0x40] sm:$0xff]
    %v289 = vld [vmem:[%s1 + $0x48] sm:$0xff]
    %v290 = vld [vmem:[%s1 + $0x50] sm:$0x1]
    %v291 = vlaneseq
    %v292 = vshrl.u32 %v291, 7
    %v293 = vsub.s32 0, %v292
    %v294 = vrot.slane %v290, %v293
    %v296 = vsel %vm16, %v280, 0
    %v299 = vsel %vm16, %v281, 0
    %301 = vmatprep.subr.mxu0 0.0
    %302 = vmatpush1.msra.mxu0 %v282
    %303 = vmatprep.subr.mxu0 0.0
    %304 = vmatpush1.msra.mxu0 %v283
    %305 = vmatprep.subr.mxu0 0.0
    %306 = vmatpush1.msra.mxu0 %v284
    %307 = vmatprep.subr.mxu0 0.0
    %308 = vmatpush1.msra.mxu0 %v285
    %309 = vmatprep.subr.mxu0 0.0
    %310 = vmatpush1.msra.mxu0 %v286
    %311 = vmatprep.subr.mxu0 0.0
    %312 = vmatpush1.msra.mxu0 %v287
    %313 = vmatprep.subr.mxu0 0.0
    %314 = vmatpush1.msra.mxu0 %v288
    %315 = vmatprep.subr.mxu0 0.0
    %316 = vmatpush1.msra.mxu0 %v289
    %317 = vmatprep.subr.mxu0 0.0
    %318 = vmatpush1.msra.mxu0 0.0
    %319 = vmatprep.subr.mxu0 0.0
    %320 = vmatpush1.msra.mxu0 0.0
    %321 = vmatprep.subr.mxu0 0.0
    %322 = vmatpush1.msra.mxu0 0.0
    %323 = vmatprep.subr.mxu0 0.0
    %324 = vmatpush1.msra.mxu0 0.0
    %325 = vmatprep.subr.mxu0 0.0
    %326 = vmatpush1.msra.mxu0 0.0
    %327 = vmatprep.subr.mxu0 0.0
    %328 = vmatpush1.msra.mxu0 0.0
    %329 = vmatprep.subr.mxu0 0.0
    %330 = vmatpush1.msra.mxu0 0.0
    %331 = vmatprep.subr.mxu0 0.0
    %332 = vmatpush1.msra.mxu0 0.0
    %333 = vmatprep.subr.mxu0 0.0
    %334 = vmatpush1.msra.mxu0 0.0
    %335 = vmatprep.subr.mxu0 0.0
    %336 = vmatpush1.msra.mxu0 0.0
    %337 = vmatprep.subr.mxu0 0.0
    %338 = vmatpush1.msra.mxu0 0.0
    %339 = vmatprep.subr.mxu0 0.0
    %340 = vmatpush1.msra.mxu0 0.0
    %341 = vmatprep.subr.mxu0 0.0
    %342 = vmatpush1.msra.mxu0 0.0
    %343 = vmatprep.subr.mxu0 0.0
    %344 = vmatpush1.msra.mxu0 0.0
    %345 = vmatprep.subr.mxu0 0.0
    %346 = vmatpush1.msra.mxu0 0.0
    %347 = vmatprep.subr.mxu0 0.0
    %348 = vmatpush1.msra.mxu0 0.0
    %349 = vmatprep.subr.mxu0 0.0
    %350 = vmatpush1.msra.mxu0 0.0
    %351 = vmatprep.subr.mxu0 0.0
    %352 = vmatpush1.msra.mxu0 0.0
    %353 = vmatprep.subr.mxu0 0.0
    %354 = vmatpush1.msra.mxu0 0.0
    %355 = vmatprep.subr.mxu0 0.0
    %356 = vmatpush1.msra.mxu0 0.0
    %357 = vmatprep.subr.mxu0 0.0
    %358 = vmatpush1.msra.mxu0 0.0
    %359 = vmatprep.subr.mxu0 0.0
    %360 = vmatpush1.msra.mxu0 0.0
    %361 = vmatprep.subr.mxu0 0.0
    %362 = vmatpush1.msra.mxu0 0.0
    %363 = vmatprep.subr.mxu0 0.0
    %364 = vmatpush1.msra.mxu0 0.0
    %365 = vmatprep.mubr.f32.mxu0 0.0
    %366 = vmatmul.mubr.f32.gmra.mrb[0].mxu0 %v296
    %v367 = vpop.f32.mrb[0].mxu0
    %v368 = vadd.f32 %v294, %v367
    %v369 = vpop.f32.mrb[0].mxu0
    %370 = vmatprep.mubr.f32.mxu0 0.0
    %371 = vmatmul.mubr.f32.gmra.mrb[0].mxu0 %v299
    %v372 = vpop.f32.mrb[0].mxu0
    %v373 = vadd.f32 %v294, %v372
    %v374 = vpop.f32.mrb[0].mxu0
    %375 = vdwg.mxu0
    %v377 = vsel %vm104, %v124, 0
    %v380 = vsel %vm104, %v126, 0
    %382 = vmatprep.subr.mxu0 0.0
    %383 = vmatpush1.msra.mxu0 %v368
    %384 = vmatprep.subr.mxu0 0.0
    %385 = vmatpush1.msra.mxu0 %v373
    %386 = vmatprep.subr.mxu0 0.0
    %387 = vmatpush1.msra.mxu0 0.0
    %388 = vmatprep.subr.mxu0 0.0
    %389 = vmatpush1.msra.mxu0 0.0
    %390 = vmatprep.subr.mxu0 0.0
    %391 = vmatpush1.msra.mxu0 0.0
    %392 = vmatprep.subr.mxu0 0.0
    %393 = vmatpush1.msra.mxu0 0.0
    %394 = vmatprep.subr.mxu0 0.0
    %395 = vmatpush1.msra.mxu0 0.0
    %396 = vmatprep.subr.mxu0 0.0
    %397 = vmatpush1.msra.mxu0 0.0
    %398 = vmatprep.subr.mxu0 0.0
    %399 = vmatpush1.msra.mxu0 0.0
    %400 = vmatprep.subr.mxu0 0.0
    %401 = vmatpush1.msra.mxu0 0.0
    %402 = vmatprep.subr.mxu0 0.0
    %403 = vmatpush1.msra.mxu0 0.0
    %404 = vmatprep.subr.mxu0 0.0
    %405 = vmatpush1.msra.mxu0 0.0
    %406 = vmatprep.subr.mxu0 0.0
    %407 = vmatpush1.msra.mxu0 0.0
    %408 = vmatprep.subr.mxu0 0.0
    %409 = vmatpush1.msra.mxu0 0.0
    %410 = vmatprep.subr.mxu0 0.0
    %411 = vmatpush1.msra.mxu0 0.0
    %412 = vmatprep.subr.mxu0 0.0
    %413 = vmatpush1.msra.mxu0 0.0
    %414 = vmatprep.subr.mxu0 0.0
    %415 = vmatpush1.msra.mxu0 0.0
    %416 = vmatprep.subr.mxu0 0.0
    %417 = vmatpush1.msra.mxu0 0.0
    %418 = vmatprep.subr.mxu0 0.0
    %419 = vmatpush1.msra.mxu0 0.0
    %420 = vmatprep.subr.mxu0 0.0
    %421 = vmatpush1.msra.mxu0 0.0
    %422 = vmatprep.subr.mxu0 0.0
    %423 = vmatpush1.msra.mxu0 0.0
    %424 = vmatprep.subr.mxu0 0.0
    %425 = vmatpush1.msra.mxu0 0.0
    %426 = vmatprep.subr.mxu0 0.0
    %427 = vmatpush1.msra.mxu0 0.0
    %428 = vmatprep.subr.mxu0 0.0
    %429 = vmatpush1.msra.mxu0 0.0
    %430 = vmatprep.subr.mxu0 0.0
    %431 = vmatpush1.msra.mxu0 0.0
    %432 = vmatprep.subr.mxu0 0.0
    %433 = vmatpush1.msra.mxu0 0.0
    %434 = vmatprep.subr.mxu0 0.0
    %435 = vmatpush1.msra.mxu0 0.0
    %436 = vmatprep.subr.mxu0 0.0
    %437 = vmatpush1.msra.mxu0 0.0
    %438 = vmatprep.subr.mxu0 0.0
    %439 = vmatpush1.msra.mxu0 0.0
    %440 = vmatprep.subr.mxu0 0.0
    %441 = vmatpush1.msra.mxu0 0.0
    %442 = vmatprep.subr.mxu0 0.0
    %443 = vmatpush1.msra.mxu0 0.0
    %444 = vmatprep.subr.mxu0 0.0
    %445 = vmatpush1.msra.mxu0 0.0
    %446 = vmatprep.mubr.f32.mxu0 0.0
    %447 = vmatmul.mubr.f32.gmra.mrb[0].mxu0 %v377
    %v448 = vpop.f32.mrb[0].mxu0
    %v449 = vadd.f32 0.0, %v448
    %v450 = vpop.f32.mrb[0].mxu0
    %451 = vmatprep.mubr.f32.mxu0 0.0
    %452 = vmatmul.mubr.f32.gmra.mrb[0].mxu0 %v380
    %v453 = vpop.f32.mrb[0].mxu0
    %v454 = vadd.f32 0.0, %v453
    %v455 = vpop.f32.mrb[0].mxu0
    %456 = vdwg.mxu0
    %v457 = vmax.f32 %v449, 0.0
    %v458 = vmax.f32 %v454, 0.0
    %v459 = vsel %vm276, %v457, 0.0
    %460 = vadd.xlane.f32.xlu0 %v459
    %v461 = vpop.xlane.xlu0 %460
    %v462 = vsel %vm276, %v458, 0.0
    %463 = vadd.xlane.f32.xlu0 %v462
    %v464 = vpop.xlane.xlu0 %463
    %v465 = vrcp.pop 32.0
    %v466 = vmul.f32 %v461, %v465
    %v467 = vmul.f32 %v464, %v465
    %v468 = vsub.f32 %v457, %v466
    %v469 = vsub.f32 %v458, %v467
    %v470 = vmul.f32 %v468, %v468
    %v471 = vmul.f32 %v469, %v469
    %v472 = vsel %vm276, %v470, 0.0
    %473 = vadd.xlane.f32.xlu0 %v472
    %v474 = vpop.xlane.xlu0 %473
    %v475 = vsel %vm276, %v471, 0.0
    %476 = vadd.xlane.f32.xlu0 %v475
    %v477 = vpop.xlane.xlu0 %476
    %v478 = vmul.f32 %v474, %v465
    %v479 = vmul.f32 %v477, %v465
    %v480 = vadd.f32 %v478, 1e-05
    %v481 = vadd.f32 %v479, 1e-05
    %v482 = vrsqrt.pop %v480
    %v483 = vrsqrt.pop %v481
    %v484 = vmul.f32 %v468, %v482
    %v485 = vmul.f32 %v469, %v483
    %486 = vst.msk [vmem:[#allocation2] sm:$0xff] %vm276, %v484
    %487 = vst.msk [vmem:[#allocation2 + $0x8] sm:$0xff] %vm276, %v485
    // Predicated region
    $region10: #{vision_attention_neuron_forward.1} parent=1 // pred_check
      _
    $region11: #{vision_attention_neuron_forward.1} parent=1 // pred_check_branch
      %489 = sbr.rel (0) target = $region13
    $region12: #{vision_attention_neuron_forward.1} parent=1 // pred_region
      %s491 = ssub.s32 256, 256
      %492 = vsyncadd [#allocation3], %s491
      %s493 = sshll.u32 [#allocation2], 4
      %s494 = int_to_ptr.vmem [resolvable:$true] %s493
      %499 = dma.vmem_to_hbm [thread:$0]  %s494, 256, %s2, [#allocation3], 128, 128, 8
    $region13: #{vision_attention_neuron_forward.1} parent=1 // pred_fallthru
      _
    // Predicated region
    $region14: #{vision_attention_neuron_forward.1} parent=1 // pred_check
      _
    $region15: #{vision_attention_neuron_forward.1} parent=1 // pred_check_branch
      %501 = sbr.rel (0) target = $region17
    $region16: #{vision_attention_neuron_forward.1} parent=1 // pred_region
      %502 = dma.done [#allocation3], 256
    $region17: #{vision_attention_neuron_forward.1} parent=1 // pred_fallthru
      _
    %503 = vsyncpa [#allocation3], 1

</llo_original>
